<compile_context>
chip_gen: v5e
topology: v5e:2x2
jax: 0.10.0
libtpu: 0.0.40
codegen_flags: <defaults>
</compile_context>

<pallas_src>
import functools

import jax
import jax.numpy as jnp
from jax.experimental import pallas as pl
from jax.experimental.pallas import tpu as pltpu

IGNORE_INDEX = 255.0
FG_THRESHOLD = 0.2
LANES = 128
SUBLANES = 8


def _regl1_kernel(x_ref, t_ref, *rest, rows, rt, bps, ignore_index,
                  fg_threshold, has_mask):
    if has_mask:
        m_ref, out_ref = rest
    else:
        (out_ref,) = rest

    p = pl.program_id(0)   # parallel slice (TensorCore on v7x/megacore)
    i = pl.program_id(1)   # reduction step within the slice

    @pl.when(i == 0)
    def _():
        out_ref[...] = jnp.zeros_like(out_ref)

    x = x_ref[...].astype(jnp.float32)
    t = t_ref[...].astype(jnp.float32)
    diff = jnp.abs(x - t)

    if has_mask:
        m = m_ref[...].astype(jnp.float32)
        keep = jnp.logical_and(m != ignore_index, m > fg_threshold)
        contrib = jnp.where(keep, diff, 0.0)
    else:
        contrib = diff

    # Global first row of this (unclamped) block; rows_left <= 0 for blocks
    # that are entirely past the end (their DMA index is clamped in in_map,
    # their contribution is zeroed here).
    block_row0 = (p * bps + i) * rt
    rows_left = rows - block_row0

    def _accum(c):
        # (rt,128) -> (rt//8, 8, 128) splits exactly on (8,128) tile
        # boundaries (a view); reduce the leading axis with VPU adds into the
        # resident (8,128) f32 output block.
        out_ref[...] += c.reshape(rt // SUBLANES, SUBLANES, LANES).sum(axis=0)

    @pl.when(rows_left >= rt)       # fully valid block: no masking cost
    def _():
        _accum(contrib)

    @pl.when(rows_left < rt)        # overhanging / fully-OOB block
    def _():
        row_idx = jax.lax.broadcasted_iota(jnp.int32, (rt, LANES), 0)
        _accum(jnp.where(row_idx < rows_left, contrib, 0.0))


def reg_l1_loss(output, target, mask=None, *, ignore_index=IGNORE_INDEX,
                fg_threshold=FG_THRESHOLD, row_tile=None):
    """RegL1Loss.forward: masked L1 loss with reduction='mean' (scalar)."""
    assert output.shape == target.shape
    count = output.size  # mean denominator: ALL elements (matches F.l1_loss)
    n = count

    if mask is not None and mask.shape != output.shape:
        # TODO(synk): express the broadcast through the mask BlockSpec
        # index_map instead of materializing a full-size copy (saves C x mask
        # HBM traffic for (B,1,H,W) masks).
        mask = jnp.broadcast_to(mask, output.shape)

    operands_nd = [output, target] + ([mask] if mask is not None else [])

    # Flatten to a lane-dense (rows, 128) slab. Pad (zeros) only to the
    # 128-lane quantum; overhanging block rows are masked in-kernel.
    n_padded = pl.cdiv(n, LANES) * LANES

    def to_slab(a):
        f = a.reshape(-1)
        if n_padded != n:
            f = jnp.pad(f, (0, n_padded - n))
        return f.reshape(n_padded // LANES, LANES)

    operands = [to_slab(a) for a in operands_nd]
    rows = n_padded // LANES
    sum_itemsize = sum(a.dtype.itemsize for a in operands)

    # Tile size: as large as a ~24 MiB double-buffered input budget allows,
    # capped at 8192 rows, 32-row aligned (bf16/int8 sublane-packing friendly).
    if row_tile is None:
        row_tile = (24 << 20) // (2 * LANES * sum_itemsize)
    align = 32 if rows >= 32 else SUBLANES
    rt = int(min(int(row_tile), 8192, pl.cdiv(rows, align) * align))
    rt = max(align, (rt // align) * align)

    total_blocks = pl.cdiv(rows, rt)
    # Leading "parallel" axis: uses both TensorCores on v7x/megacore chips;
    # on 1-TC chips it is just a serial outer loop (negligible overhead).
    num_parallel = 2 if total_blocks >= 2 else 1
    bps = pl.cdiv(total_blocks, num_parallel)
    max_blk = total_blocks - 1

    def in_map(p, i):
        # Clamp so fully-OOB blocks of the second slice DMA a valid window;
        # their contribution is zeroed in-kernel via the row bound.
        return (jnp.minimum(p * bps + i, max_blk), 0)

    kernel = functools.partial(
        _regl1_kernel,
        rows=rows, rt=rt, bps=bps,
        ignore_index=float(ignore_index),
        fg_threshold=float(fg_threshold),
        has_mask=mask is not None,
    )

    in_specs = [pl.BlockSpec((rt, LANES), in_map) for _ in operands]
    out_specs = pl.BlockSpec((SUBLANES, LANES), lambda p, i: (p, 0))

    # Explicit VMEM limit so large tiles also work on v5e's 16 MiB default
    # scoped VMEM; stays well under v7x's 64 MiB physical.
    need = 2 * rt * LANES * sum_itemsize
    vmem_limit = int(min(max(32 << 20, need + (8 << 20)), 64 << 20))

    partial = pl.pallas_call(
        kernel,
        out_shape=jax.ShapeDtypeStruct((num_parallel * SUBLANES, LANES),
                                       jnp.float32),
        grid_spec=pltpu.PrefetchScalarGridSpec(
            num_scalar_prefetch=0,
            grid=(num_parallel, bps),
            in_specs=in_specs,
            out_specs=out_specs,
        ),
        compiler_params=pltpu.CompilerParams(
            dimension_semantics=("parallel", "arbitrary"),
            vmem_limit_bytes=vmem_limit,
        ),
    )(*operands)

    # Tiny final reduce + divide-by-count in the wrapper (per-core partials).
    return jnp.sum(partial) / count


def _reference(output, target, mask, ignore_index=IGNORE_INDEX,
               fg_threshold=FG_THRESHOLD):
    if mask is not None:
        keep = jnp.logical_and(mask != ignore_index, mask > fg_threshold)
        keep = keep.astype(jnp.float32)
        return jnp.mean(jnp.abs(output * keep - target * keep))
    return jnp.mean(jnp.abs(output - target))


if __name__ == "__main__":
    key = jax.random.PRNGKey(0)
    k1, k2, k3, k4, k5, k6, k7 = jax.random.split(key, 7)

    # Small shapes consistent with a BEV regression map (NCHW).
    B, C, H, W = 2, 4, 16, 16
    output = jax.random.normal(k1, (B, C, H, W), dtype=jnp.float32)
    target = jax.random.normal(k2, (B, C, H, W), dtype=jnp.float32)
    mask = jax.random.uniform(k3, (B, C, H, W), dtype=jnp.float32)
    ignored = jax.random.uniform(k4, (B, C, H, W)) < 0.1
    mask = jnp.where(ignored, jnp.float32(IGNORE_INDEX), mask)

    # Masked path, default (single-block) tiling.
    loss = jax.block_until_ready(reg_l1_loss(output, target, mask))
    ref = _reference(output, target, mask)
    assert jnp.allclose(loss, ref, rtol=1e-5, atol=1e-6), (loss, ref)

    # Masked path, tiny tiles -> multi-block + 2-way parallel axis.
    loss_p = jax.block_until_ready(reg_l1_loss(output, target, mask, row_tile=8))
    assert jnp.allclose(loss_p, ref, rtol=1e-5, atol=1e-6), (loss_p, ref)

    # mask=None path.
    loss_nm = jax.block_until_ready(reg_l1_loss(output, target, None))
    ref_nm = _reference(output, target, None)
    assert jnp.allclose(loss_nm, ref_nm, rtol=1e-5, atol=1e-6), (loss_nm, ref_nm)

    # Odd shape: exercises lane padding, overhanging last block and the
    # clamped duplicate block of the 2-way split.
    shp = (3, 5, 17, 19)
    out2 = jax.random.normal(k5, shp, dtype=jnp.float32)
    tgt2 = jax.random.normal(k6, shp, dtype=jnp.float32)
    msk2 = jax.random.uniform(k7, shp, dtype=jnp.float32)
    loss2 = jax.block_until_ready(reg_l1_loss(out2, tgt2, msk2, row_tile=8))
    ref2 = _reference(out2, tgt2, msk2)
    assert jnp.allclose(loss2, ref2, rtol=1e-5, atol=1e-6), (loss2, ref2)

    print("KERNEL_OK")
</pallas_src>

<mosaic_0001>
module attributes {stable_mosaic.version = 11 : i64} {
  func.func @_regl1_kernel(%arg0: i32, %arg1: i32, %arg2: memref<16x128xf32, #tpu.memory_space<vmem>>, %arg3: memref<16x128xf32, #tpu.memory_space<vmem>>, %arg4: memref<16x128xf32, #tpu.memory_space<vmem>>, %arg5: memref<8x128xf32, #tpu.memory_space<vmem>>) attributes {dimension_semantics = [#tpu.dimension_semantics<parallel>, #tpu.dimension_semantics<arbitrary>], iteration_bounds = array<i64: 1, 1>, scalar_prefetch = 0 : i64, scratch_operands = 0 : i64, tpu.core_type = #tpu.core_type<tc>, window_params = [{transform_indices = @transform_0, window_bounds = array<i64: 16, 128>}, {transform_indices = @transform_1, window_bounds = array<i64: 16, 128>}, {transform_indices = @transform_2, window_bounds = array<i64: 16, 128>}, {transform_indices = @transform_3, window_bounds = array<i64: 8, 128>}]} {
    %c0_i32 = arith.constant 0 : i32
    %0 = arith.cmpi eq, %arg1, %c0_i32 : i32
    %1 = arith.extui %0 : i1 to i32
    %c0_i32_0 = arith.constant 0 : i32
    %2 = arith.cmpi ne, %1, %c0_i32_0 : i32
    scf.if %2 {
      %cst_13 = arith.constant 0.000000e+00 : f32
      %25 = vector.broadcast %cst_13 : f32 to vector<8x128xf32>
      %c0_14 = arith.constant 0 : index
      %c0_15 = arith.constant 0 : index
      %26 = vector.load %arg5[%c0_14, %c0_15] : memref<8x128xf32, #tpu.memory_space<vmem>>, vector<8x128xf32>
      tpu.vector_store %arg5[%c0_14, %c0_15], %25 {strides = array<i32>} : memref<8x128xf32, #tpu.memory_space<vmem>>, vector<8x128xf32>,
    } else {
    }
    %c0 = arith.constant 0 : index
    %c0_1 = arith.constant 0 : index
    %3 = vector.load %arg2[%c0, %c0_1] : memref<16x128xf32, #tpu.memory_space<vmem>>, vector<16x128xf32>
    %c0_2 = arith.constant 0 : index
    %c0_3 = arith.constant 0 : index
    %4 = vector.load %arg3[%c0_2, %c0_3] : memref<16x128xf32, #tpu.memory_space<vmem>>, vector<16x128xf32>
    %5 = arith.subf %3, %4 : vector<16x128xf32>
    %6 = math.absf %5 : vector<16x128xf32>
    %c0_4 = arith.constant 0 : index
    %c0_5 = arith.constant 0 : index
    %7 = vector.load %arg4[%c0_4, %c0_5] : memref<16x128xf32, #tpu.memory_space<vmem>>, vector<16x128xf32>
    %cst = arith.constant 2.550000e+02 : f32
    %8 = vector.broadcast %cst : f32 to vector<16x128xf32>
    %9 = arith.cmpf one, %7, %8 : vector<16x128xf32>
    %cst_6 = arith.constant 2.000000e-01 : f32
    %10 = vector.broadcast %cst_6 : f32 to vector<16x128xf32>
    %11 = arith.cmpf ogt, %7, %10 : vector<16x128xf32>
    %12 = arith.andi %9, %11 : vector<16x128xi1>
    %cst_7 = arith.constant 0.000000e+00 : f32
    %13 = vector.broadcast %cst_7 : f32 to vector<16x128xf32>
    %14 = arith.select %12, %6, %13 : vector<16x128xi1>, vector<16x128xf32>
    %c1_i32 = arith.constant 1 : i32
    %15 = arith.muli %arg0, %c1_i32 : i32
    %16 = arith.addi %15, %arg1 : i32
    %c16_i32 = arith.constant 16 : i32
    %17 = arith.muli %16, %c16_i32 : i32
    %c16_i32_8 = arith.constant 16 : i32
    %18 = arith.subi %c16_i32_8, %17 : i32
    %c16_i32_9 = arith.constant 16 : i32
    %19 = arith.cmpi sge, %18, %c16_i32_9 : i32
    %20 = arith.extui %19 : i1 to i32
    %c0_i32_10 = arith.constant 0 : i32
    %21 = arith.cmpi ne, %20, %c0_i32_10 : i32
    scf.if %21 {
      %c0_13 = arith.constant 0 : index
      %c0_14 = arith.constant 0 : index
      %25 = vector.load %arg5[%c0_13, %c0_14] : memref<8x128xf32, #tpu.memory_space<vmem>>, vector<8x128xf32>
      %26 = vector.shape_cast %14 : vector<16x128xf32> to vector<2x8x128xf32>
      %cst_15 = arith.constant dense<0.000000e+00> : vector<8x128xf32>
      %27 = vector.multi_reduction <add>, %26, %cst_15 [0] : vector<2x8x128xf32> to vector<8x128xf32>
      %28 = arith.addf %25, %27 : vector<8x128xf32>
      %c0_16 = arith.constant 0 : index
      %c0_17 = arith.constant 0 : index
      %29 = vector.load %arg5[%c0_16, %c0_17] : memref<8x128xf32, #tpu.memory_space<vmem>>, vector<8x128xf32>
      tpu.vector_store %arg5[%c0_16, %c0_17], %28 {strides = array<i32>} : memref<8x128xf32, #tpu.memory_space<vmem>>, vector<8x128xf32>,
    } else {
    }
    %c16_i32_11 = arith.constant 16 : i32
    %22 = arith.cmpi slt, %18, %c16_i32_11 : i32
    %23 = arith.extui %22 : i1 to i32
    %c0_i32_12 = arith.constant 0 : i32
    %24 = arith.cmpi ne, %23, %c0_i32_12 : i32
    scf.if %24 {
      %25 = tpu.iota {dimensions = array<i32: 0>} : vector<16x128xi32>
      %26 = vector.broadcast %18 : i32 to vector<16x128xi32>
      %27 = arith.cmpi slt, %25, %26 : vector<16x128xi32>
      %cst_13 = arith.constant 0.000000e+00 : f32
      %28 = vector.broadcast %cst_13 : f32 to vector<16x128xf32>
      %29 = arith.select %27, %14, %28 : vector<16x128xi1>, vector<16x128xf32>
      %c0_14 = arith.constant 0 : index
      %c0_15 = arith.constant 0 : index
      %30 = vector.load %arg5[%c0_14, %c0_15] : memref<8x128xf32, #tpu.memory_space<vmem>>, vector<8x128xf32>
      %31 = vector.shape_cast %29 : vector<16x128xf32> to vector<2x8x128xf32>
      %cst_16 = arith.constant dense<0.000000e+00> : vector<8x128xf32>
      %32 = vector.multi_reduction <add>, %31, %cst_16 [0] : vector<2x8x128xf32> to vector<8x128xf32>
      %33 = arith.addf %30, %32 : vector<8x128xf32>
      %c0_17 = arith.constant 0 : index
      %c0_18 = arith.constant 0 : index
      %34 = vector.load %arg5[%c0_17, %c0_18] : memref<8x128xf32, #tpu.memory_space<vmem>>, vector<8x128xf32>
      tpu.vector_store %arg5[%c0_17, %c0_18], %33 {strides = array<i32>} : memref<8x128xf32, #tpu.memory_space<vmem>>, vector<8x128xf32>,
    } else {
    }
    return
  }
  func.func @transform_0(%arg0: i32, %arg1: i32) -> (i32, i32) {
    %c1_i32 = arith.constant 1 : i32
    %0 = arith.muli %arg0, %c1_i32 : i32
    %1 = arith.addi %0, %arg1 : i32
    %c0_i32 = arith.constant 0 : i32
    %2 = arith.minsi %1, %c0_i32 : i32
    %c0_i32_0 = arith.constant 0 : i32
    %c0_i32_1 = arith.constant 0 : i32
    return %2, %c0_i32_0 : i32, i32
  }
  func.func @transform_1(%arg0: i32, %arg1: i32) -> (i32, i32) {
    %c1_i32 = arith.constant 1 : i32
    %0 = arith.muli %arg0, %c1_i32 : i32
    %1 = arith.addi %0, %arg1 : i32
    %c0_i32 = arith.constant 0 : i32
    %2 = arith.minsi %1, %c0_i32 : i32
    %c0_i32_0 = arith.constant 0 : i32
    %c0_i32_1 = arith.constant 0 : i32
    return %2, %c0_i32_0 : i32, i32
  }
  func.func @transform_2(%arg0: i32, %arg1: i32) -> (i32, i32) {
    %c1_i32 = arith.constant 1 : i32
    %0 = arith.muli %arg0, %c1_i32 : i32
    %1 = arith.addi %0, %arg1 : i32
    %c0_i32 = arith.constant 0 : i32
    %2 = arith.minsi %1, %c0_i32 : i32
    %c0_i32_0 = arith.constant 0 : i32
    %c0_i32_1 = arith.constant 0 : i32
    return %2, %c0_i32_0 : i32, i32
  }
  func.func @transform_3(%arg0: i32, %arg1: i32) -> (i32, i32) {
    %c0_i32 = arith.constant 0 : i32
    %c0_i32_0 = arith.constant 0 : i32
    return %arg0, %c0_i32 : i32, i32
  }
}

</mosaic_0001>

<llo_original>
// kernel: tpu_custom_call.1
$region0: #{tpu_custom_call.1}
  #allocation0 [shape = 'u32[]', space=smem, size = 0x4, offset = 0x4, fixed_abs, tag = 'smem constant byte address 0x4 - core index']
  #allocation1 [shape = 'u32[72,128]{1,0:T(1,128)}', space=vmem, size = 0x9000, scoped, tag = 'internal scratch']
  %s0 = inlined_call_operand.hbm [shape: f32[16,128], index: 0, kind: input, shape index: {}]
  %s1 = inlined_call_operand.hbm [shape: f32[16,128], index: 1, kind: input, shape index: {}]
  %s2 = inlined_call_operand.hbm [shape: f32[16,128], index: 2, kind: input, shape index: {}]
  %s3 = inlined_call_operand.hbm [shape: f32[8,128], index: 3, kind: output, shape index: {}]
  %s4 = sld [smem:[#allocation0]]
  $region46: #{tpu_custom_call.1} parent=0
    _
  %s6 = ssub.s32 1, %s4
  %s7 = scalar_select 0, %s6, %s4
  $region1: #{tpu_custom_call.1} parent=0
    #allocation2 [shape = 'u8[8192]{0}', space=vmem, size = 0x2000, scoped, tag = 'input window, operand 0, single buffered']
    #allocation3 [shape = 's32[1]{0}', space=sflag, size = 0x4, scoped, tag = 'scoped memory for tpu_custom_call.1']
    #allocation4 [shape = 's32[1]{0}', space=sflag, size = 0x4, scoped, tag = 'scoped memory for tpu_custom_call.1']
    #allocation5 [shape = 'u8[8192]{0}', space=vmem, size = 0x2000, scoped, tag = 'input window, operand 1, single buffered']
    #allocation6 [shape = 's32[1]{0}', space=sflag, size = 0x4, scoped, tag = 'scoped memory for tpu_custom_call.1']
    #allocation7 [shape = 'u8[8192]{0}', space=vmem, size = 0x2000, scoped, tag = 'input window, operand 2, single buffered']
    #allocation8 [shape = 'u8[4096]{0}', space=vmem, size = 0x1000, scoped, tag = 'output window, operand 0, single buffered']
    %8 = vsyncpa [#allocation3], 0
    %9 = vsyncpa [#allocation6], 0
    %10 = vsyncpa [#allocation4], 0
    // Predicated region
    $region2: #{tpu_custom_call.1} parent=1 // pred_check
      _
    $region3: #{tpu_custom_call.1} parent=1 // pred_check_branch
      %12 = sbr.rel (0) target = $region5
    $region4: #{tpu_custom_call.1} parent=1 // pred_region
      %s13 = sadd.s32 0, 0
      %p14 = scmp.lt.s32.totalorder %s13, 0
      %s15 = scalar_select %p14, %s13, 0
      %s16 = smul.u32 2, %s15
      %18 = vsyncadd [#allocation3], 0
      %s19 = smul.addr %s16, 8
      %s20 = scalar_lea.hbm %s0, %s19
      %s21 = sshll.u32 %s20, 4
      %s22 = int_to_ptr.hbm [resolvable:$true] %s21
      %s23 = sshll.u32 [#allocation2], 4
      %s24 = int_to_ptr.vmem [resolvable:$true] %s23
      %29 = dma.hbm_to_vmem [thread:$0]  %s22, 256, %s24, [#allocation3], 128, 128, 8
    $region5: #{tpu_custom_call.1} parent=1 // pred_fallthru
      _
    // Predicated region
    $region6: #{tpu_custom_call.1} parent=1 // pred_check
      _
    $region7: #{tpu_custom_call.1} parent=1 // pred_check_branch
      %31 = sbr.rel (0) target = $region9
    $region8: #{tpu_custom_call.1} parent=1 // pred_region
      %s32 = sadd.s32 0, 0
      %p33 = scmp.lt.s32.totalorder %s32, 0
      %s34 = scalar_select %p33, %s32, 0
      %s35 = smul.u32 2, %s34
      %37 = vsyncadd [#allocation6], 0
      %s38 = smul.addr %s35, 8
      %s39 = scalar_lea.hbm %s1, %s38
      %s40 = sshll.u32 %s39, 4
      %s41 = int_to_ptr.hbm [resolvable:$true] %s40
      %s42 = sshll.u32 [#allocation5], 4
      %s43 = int_to_ptr.vmem [resolvable:$true] %s42
      %48 = dma.hbm_to_vmem [thread:$0]  %s41, 256, %s43, [#allocation6], 128, 128, 8
    $region9: #{tpu_custom_call.1} parent=1 // pred_fallthru
      _
    // Predicated region
    $region10: #{tpu_custom_call.1} parent=1 // pred_check
      _
    $region11: #{tpu_custom_call.1} parent=1 // pred_check_branch
      %50 = sbr.rel (0) target = $region13
    $region12: #{tpu_custom_call.1} parent=1 // pred_region
      %s51 = sadd.s32 0, 0
      %p52 = scmp.lt.s32.totalorder %s51, 0
      %s53 = scalar_select %p52, %s51, 0
      %s54 = smul.u32 2, %s53
      %56 = vsyncadd [#allocation6], 0
      %s57 = smul.addr %s54, 8
      %s58 = scalar_lea.hbm %s2, %s57
      %s59 = sshll.u32 %s58, 4
      %s60 = int_to_ptr.hbm [resolvable:$true] %s59
      %s61 = sshll.u32 [#allocation7], 4
      %s62 = int_to_ptr.vmem [resolvable:$true] %s61
      %67 = dma.hbm_to_vmem [thread:$0]  %s60, 256, %s62, [#allocation6], 128, 128, 8
    $region13: #{tpu_custom_call.1} parent=1 // pred_fallthru
      _
    // Predicated region
    $region14: #{tpu_custom_call.1} parent=1 // pred_check
      _
    $region15: #{tpu_custom_call.1} parent=1 // pred_check_branch
      %69 = sbr.rel (0) target = $region17
    $region16: #{tpu_custom_call.1} parent=1 // pred_region
      %71 = dma.done [#allocation3], 256
    $region17: #{tpu_custom_call.1} parent=1 // pred_fallthru
      _
    // Predicated region
    $region18: #{tpu_custom_call.1} parent=1 // pred_check
      _
    $region19: #{tpu_custom_call.1} parent=1 // pred_check_branch
      %73 = sbr.rel (0) target = $region21
    $region20: #{tpu_custom_call.1} parent=1 // pred_region
      %75 = dma.done [#allocation6], 256
    $region21: #{tpu_custom_call.1} parent=1 // pred_fallthru
      _
    // Predicated region
    $region22: #{tpu_custom_call.1} parent=1 // pred_check
      _
    $region23: #{tpu_custom_call.1} parent=1 // pred_check_branch
      %77 = sbr.rel (0) target = $region25
    $region24: #{tpu_custom_call.1} parent=1 // pred_region
      %79 = dma.done [#allocation6], 256
    $region25: #{tpu_custom_call.1} parent=1 // pred_fallthru
      _
    %s80 = sadd.s32 0, 0
    %p81 = scmp.lt.s32.totalorder %s80, 0
    %s82 = scalar_select %p81, %s80, 0
    %s83 = smul.u32 2, %s82
    %s84 = sadd.s32 0, 0
    %p85 = scmp.lt.s32.totalorder %s84, 0
    %s86 = scalar_select %p85, %s84, 0
    %s87 = smul.u32 2, %s86
    %s88 = sadd.s32 0, 0
    %p89 = scmp.lt.s32.totalorder %s88, 0
    %s90 = scalar_select %p89, %s88, 0
    %s91 = smul.u32 2, %s90
    %p92 = scmp.eq.s32.totalorder 0, 0
    // Predicated region
    $region26: #{tpu_custom_call.1} parent=1 // pred_check
      %p93 = pneg %p92
    $region27: #{tpu_custom_call.1} parent=1 // pred_check_branch
      %95 = sbr.rel (%p93) target = $region29
    $region28: #{tpu_custom_call.1} parent=1 // pred_region
      %96 = vst [vmem:[#allocation8] sm:$0xff] 0.0
    $region29: #{tpu_custom_call.1} parent=1 // pred_fallthru
      _
    %v97 = vld [vmem:[#allocation2] sm:$0xff]
    %v98 = vld [vmem:[#allocation2 + $0x8] sm:$0xff]
    %v99 = vld [vmem:[#allocation5] sm:$0xff]
    %v100 = vld [vmem:[#allocation5 + $0x8] sm:$0xff]
    %v101 = vsub.f32 %v97, %v99
    %v102 = vsub.f32 %v98, %v100
    %v103 = vand.u32 2147483647, %v101
    %v104 = vand.u32 2147483647, %v102
    %v105 = vld [vmem:[#allocation7] sm:$0xff]
    %v106 = vld [vmem:[#allocation7 + $0x8] sm:$0xff]
    %vm107 = vcmp.ne.f32.partialorder %v105, 255.0
    %vm108 = vcmp.ne.f32.partialorder %v106, 255.0
    %vm109 = vcmp.gt.f32.partialorder %v105, 0.2
    %vm110 = vcmp.gt.f32.partialorder %v106, 0.2
    %vm111 = vmand %vm107, %vm109
    %vm112 = vmand %vm108, %vm110
    %v113 = vsel %vm111, %v103, 0.0
    %v114 = vsel %vm112, %v104, 0.0
    %s115 = sadd.s32 0, 0
    %s116 = smul.u32 %s115, 16
    %s117 = ssub.s32 16, %s116
    %p118 = scmp.ge.s32.totalorder %s117, 16
    // Predicated region
    $region30: #{tpu_custom_call.1} parent=1 // pred_check
      %p119 = pneg %p118
    $region31: #{tpu_custom_call.1} parent=1 // pred_check_branch
      %121 = sbr.rel (%p119) target = $region33
    $region32: #{tpu_custom_call.1} parent=1 // pred_region
      %v122 = vld [vmem:[#allocation8] sm:$0xff]
      %v123 = vadd.f32 %v113, %v114
      %v124 = vadd.f32 %v122, %v123
      %125 = vst [vmem:[#allocation8] sm:$0xff] %v124
    $region33: #{tpu_custom_call.1} parent=1 // pred_fallthru
      _
    %p126 = scmp.lt.s32.totalorder %s117, 16
    // Predicated region
    $region34: #{tpu_custom_call.1} parent=1 // pred_check
      %p127 = pneg %p126
    $region35: #{tpu_custom_call.1} parent=1 // pred_check_branch
      %129 = sbr.rel (%p127) target = $region37
    $region36: #{tpu_custom_call.1} parent=1 // pred_region
      %v130 = vlaneseq
      %v131 = vshrl.u32 %v130, 7
      %v132 = vadd.s32 %v131, 8
      %v133 = vstv %s117
      %vm134 = vcmp.lt.s32.totalorder %v131, %v133
      %vm135 = vcmp.lt.s32.totalorder %v132, %v133
      %v136 = vsel %vm134, %v113, 0.0
      %v137 = vsel %vm135, %v114, 0.0
      %v138 = vld [vmem:[#allocation8] sm:$0xff]
      %v139 = vadd.f32 %v136, %v137
      %v140 = vadd.f32 %v138, %v139
      %141 = vst [vmem:[#allocation8] sm:$0xff] %v140
    $region37: #{tpu_custom_call.1} parent=1 // pred_fallthru
      _
    // Predicated region
    $region38: #{tpu_custom_call.1} parent=1 // pred_check
      _
    $region39: #{tpu_custom_call.1} parent=1 // pred_check_branch
      %143 = sbr.rel (0) target = $region41
    $region40: #{tpu_custom_call.1} parent=1 // pred_region
      %145 = vsyncadd [#allocation4], 0
      %s147 = sshll.u32 [#allocation8], 4
      %s148 = int_to_ptr.vmem [resolvable:$true] %s147
      %s149 = sshll.u32 %s3, 4
      %s150 = int_to_ptr.hbm [resolvable:$true] %s149
      %152 = dma.vmem_to_hbm [thread:$0]  %s148, 128, %s150, [#allocation4]
    $region41: #{tpu_custom_call.1} parent=1 // pred_fallthru
      _
    // Predicated region
    $region42: #{tpu_custom_call.1} parent=1 // pred_check
      _
    $region43: #{tpu_custom_call.1} parent=1 // pred_check_branch
      %154 = sbr.rel (0) target = $region45
    $region44: #{tpu_custom_call.1} parent=1 // pred_region
      %156 = dma.done [#allocation4], 128
    $region45: #{tpu_custom_call.1} parent=1 // pred_fallthru
      _
    %157 = vsyncpa [#allocation3], 1
    %158 = vsyncpa [#allocation6], 1
    %159 = vsyncpa [#allocation4], 1

</llo_original>
